<compile_context>
chip_gen: v5e
topology: v5e:2x2
jax: 0.10.0
libtpu: 0.0.40
codegen_flags: <defaults>
</compile_context>

<pallas_src>
import jax
import jax.numpy as jnp
from jax.experimental import pallas as pl
from jax.experimental.pallas import tpu as pltpu


def _silu(x):
    # x * sigmoid(x): exp/recip land on the EUP, mul on the VALU.
    return x * jax.nn.sigmoid(x)


def head_kernel(bert_ref, lp_ref,
                wp_ref, bp_ref,
                w1b_ref, w1p_ref, b1_ref,
                wpool_ref, bpool_ref,
                w2_ref, b2_ref,
                out_ref):
    Bblk, S, D = bert_ref.shape
    H = w1b_ref.shape[1]
    rows = Bblk * S

    # Merge (Bblk, S) into the sublane dim; lane dim (D) untouched -> free view.
    bert = bert_ref[...].reshape(rows, D)            # bf16 [rows, 768]
    lp = lp_ref[...].reshape(rows, 1)                # f32  [rows, 1]

    # prob_proj = SiLU(Linear(1 -> P)); K=1 matmul degenerates to a VPU broadcast.
    prob = _silu(lp * wp_ref[...] + bp_ref[...])     # [rows, P] f32

    # cls1 = SiLU(Linear(768 + P -> H)); the concat is folded into two matmuls.
    h = (jnp.dot(bert, w1b_ref[...], preferred_element_type=jnp.float32)
         + jnp.dot(prob, w1p_ref[...], preferred_element_type=jnp.float32)
         + b1_ref[...])
    pre = _silu(h)                                   # [rows, H] f32

    # pool = Linear(H -> H) then Softmax over the sequence dim (torch dim=1).
    logits = (jnp.dot(pre.astype(wpool_ref.dtype), wpool_ref[...],
                      preferred_element_type=jnp.float32)
              + bpool_ref[...])                      # [rows, H] f32
    lg = logits.reshape(Bblk, S, H)                  # split sublane dim -> free
    m = jnp.max(lg, axis=1, keepdims=True)           # XLU cross-sublane reduce
    e = jnp.exp(lg - m)                               # EUP
    denom = jnp.sum(e, axis=1, keepdims=True)
    attn = e * pl.reciprocal(denom, approx=True)      # EUP reciprocal + VALU mul

    # pooled = (attn * pre_pool).sum(dim=1)
    pooled = jnp.sum(attn * pre.reshape(Bblk, S, H), axis=1)   # [Bblk, H] f32

    # cls2 = Linear(H -> 1); N=1 matmul -> VPU mul + lane reduce (no MXU).
    out = jnp.sum(pooled * w2_ref[...], axis=-1, keepdims=True) + b2_ref[...]
    out_ref[...] = out.reshape(1, Bblk)              # lane-dense store


def _pick_batch_block(B, S, target_rows):
    """Largest divisor of B with B_blk * S <= target_rows (fallback 1)."""
    best = 1
    for cand in range(1, B + 1):
        if B % cand == 0 and cand * S <= target_rows:
            best = cand
    return best


def hallucination_head(bert_last_hidden, token_logprobs, params, *,
                       target_rows=1024):
    """Head of HallucinationDetectorA (everything after BERT + dropout)."""
    B, S, D = bert_last_hidden.shape
    H = params["w1b"].shape[1]
    P = params["wp"].shape[1]

    B_blk = _pick_batch_block(B, S, target_rows)
    num_blk = B // B_blk

    bert = bert_last_hidden.astype(jnp.bfloat16)       # no-op if already bf16
    lp = token_logprobs.astype(jnp.float32).reshape(B, S, 1)

    const2 = lambda b: (0, 0)                          # resident weights

    args = (bert, lp,
            params["wp"], params["bp"],
            params["w1b"], params["w1p"], params["b1"],
            params["wpool"], params["bpool"],
            params["w2"], params["b2"])

    in_specs = [
        pl.BlockSpec((B_blk, S, D), lambda b: (b, 0, 0)),   # bert tile (bf16)
        pl.BlockSpec((B_blk, S, 1), lambda b: (b, 0, 0)),   # logprob tile (f32)
        pl.BlockSpec((1, P), const2),                       # wp
        pl.BlockSpec((1, P), const2),                       # bp
        pl.BlockSpec((D, H), const2),                       # w1b (bf16)
        pl.BlockSpec((P, H), const2),                       # w1p
        pl.BlockSpec((1, H), const2),                       # b1
        pl.BlockSpec((H, H), const2),                       # wpool (bf16)
        pl.BlockSpec((1, H), const2),                       # bpool
        pl.BlockSpec((1, H), const2),                       # w2 (row vector)
        pl.BlockSpec((1, 1), const2),                       # b2
    ]

    out = pl.pallas_call(
        head_kernel,
        grid=(num_blk,),
        in_specs=in_specs,
        out_specs=pl.BlockSpec((1, B_blk), lambda b: (b, 0)),
        out_shape=jax.ShapeDtypeStruct((num_blk, B_blk), jnp.float32),
        compiler_params=pltpu.CompilerParams(
            dimension_semantics=("parallel",),
            vmem_limit_bytes=64 * 1024 * 1024),
    )(*args)
    return out.reshape(B)                              # squeeze(-1) -> [B]


def init_params(key, bert_dim=768, hidden=128, prob_embed=32):
    """Parameter init matching the module's shapes.

    Weights are stored transposed as (in_features, out_features) so the kernel
    computes x @ W.  `pool[0].weight` is zeroed per __init__.  The large MXU
    operands (w1b, wpool) are stored in bf16; everything else stays f32.
    """
    ks = jax.random.split(key, 4)

    def lin(k, fan_in, fan_out):
        kw, kb = jax.random.split(k)
        bound = 1.0 / jnp.sqrt(jnp.float32(fan_in))
        w = jax.random.uniform(kw, (fan_in, fan_out), jnp.float32, -bound, bound)
        b = jax.random.uniform(kb, (1, fan_out), jnp.float32, -bound, bound)
        return w, b

    wp, bp = lin(ks[0], 1, prob_embed)                       # prob_proj
    w1, b1 = lin(ks[1], bert_dim + prob_embed, hidden)       # cls1
    w1b = w1[:bert_dim].astype(jnp.bfloat16)
    w1p = w1[bert_dim:]
    wpool, bpool = lin(ks[2], hidden, hidden)                # pool
    wpool = jnp.zeros_like(wpool).astype(jnp.bfloat16)       # pool[0].weight *= 0
    w2, b2 = lin(ks[3], hidden, 1)                           # cls2
    w2 = w2.reshape(1, hidden)                               # row vector for VPU path

    return dict(wp=wp, bp=bp, w1b=w1b, w1p=w1p, b1=b1,
                wpool=wpool, bpool=bpool, w2=w2, b2=b2)


def head_reference(bert_last_hidden, token_logprobs, params):
    """Pure-JAX reference of the same head (f32)."""
    x = bert_last_hidden.astype(jnp.float32)                  # [B,S,768]
    lp = token_logprobs.astype(jnp.float32)[..., None]        # [B,S,1]
    prob = jax.nn.silu(lp * params["wp"].reshape(-1) + params["bp"].reshape(-1))
    h = (x @ params["w1b"].astype(jnp.float32)
         + prob @ params["w1p"]
         + params["b1"].reshape(-1))
    pre = jax.nn.silu(h)                                      # [B,S,H]
    logits = pre @ params["wpool"].astype(jnp.float32) + params["bpool"].reshape(-1)
    attn = jax.nn.softmax(logits, axis=1)                     # over sequence
    pooled = jnp.sum(attn * pre, axis=1)                      # [B,H]
    out = jnp.sum(pooled * params["w2"].reshape(-1), axis=-1) + params["b2"].reshape(-1)
    return out                                                # [B]


def _run_case(key, B, S, bert_dim, hidden, prob_embed, target_rows):
    k1, k2, k3, k4 = jax.random.split(key, 4)
    # input_ids / attention_mask are only consumed by BERT (not re-implemented).
    _input_ids = jax.random.randint(k1, (B, S), 0, 30522)
    _attention_mask = jnp.ones((B, S), jnp.int32)
    bert_last_hidden = jax.random.normal(
        k2, (B, S, bert_dim), jnp.float32).astype(jnp.bfloat16)
    token_logprobs = -jax.random.uniform(k3, (B, S), jnp.float32)
    params = init_params(k4, bert_dim, hidden, prob_embed)

    out = hallucination_head(bert_last_hidden, token_logprobs, params,
                             target_rows=target_rows)
    out = jax.block_until_ready(out)
    assert out.shape == (B,), out.shape
    assert bool(jnp.all(jnp.isfinite(out)))

    ref = head_reference(bert_last_hidden, token_logprobs, params)
    assert bool(jnp.allclose(out, ref, rtol=2e-2, atol=2e-2)), (out, ref)
    return out


if __name__ == "__main__":
    BERT_D, H, P = 768, 128, 32
    key = jax.random.PRNGKey(0)
    k_small, k_big = jax.random.split(key)

    # Small demo shapes (B=2, S=8): single grid step.
    _run_case(k_small, B=2, S=8, bert_dim=BERT_D, hidden=H, prob_embed=P,
              target_rows=1024)

    # Slightly larger batch with a small tile target to exercise the multi-step
    # pipelined grid (resident weights, per-block output stores).
    _run_case(k_big, B=16, S=8, bert_dim=BERT_D, hidden=H, prob_embed=P,
              target_rows=64)

    print("KERNEL_OK")
</pallas_src>

<mosaic_0001>
module attributes {stable_mosaic.version = 11 : i64} {
  func.func @head_kernel(%arg0: i32, %arg1: memref<2x8x768xbf16, #tpu.memory_space<vmem>>, %arg2: memref<2x8x1xf32, #tpu.memory_space<vmem>>, %arg3: memref<1x32xf32, #tpu.memory_space<vmem>>, %arg4: memref<1x32xf32, #tpu.memory_space<vmem>>, %arg5: memref<768x128xbf16, #tpu.memory_space<vmem>>, %arg6: memref<32x128xf32, #tpu.memory_space<vmem>>, %arg7: memref<1x128xf32, #tpu.memory_space<vmem>>, %arg8: memref<128x128xbf16, #tpu.memory_space<vmem>>, %arg9: memref<1x128xf32, #tpu.memory_space<vmem>>, %arg10: memref<1x128xf32, #tpu.memory_space<vmem>>, %arg11: memref<1x1xf32, #tpu.memory_space<vmem>>, %arg12: memref<1x2xf32, #tpu.memory_space<vmem>>) attributes {dimension_semantics = [#tpu.dimension_semantics<parallel>], iteration_bounds = array<i64: 1>, scalar_prefetch = 0 : i64, scratch_operands = 0 : i64, tpu.core_type = #tpu.core_type<tc>, window_params = [{transform_indices = @transform_0, window_bounds = array<i64: 2, 8, 768>}, {transform_indices = @transform_1, window_bounds = array<i64: 2, 8, 1>}, {pipeline_mode = #tpu.pipeline_mode<synchronous>, transform_indices = @transform_2, window_bounds = array<i64: 1, 32>}, {pipeline_mode = #tpu.pipeline_mode<synchronous>, transform_indices = @transform_3, window_bounds = array<i64: 1, 32>}, {pipeline_mode = #tpu.pipeline_mode<synchronous>, transform_indices = @transform_4, window_bounds = array<i64: 768, 128>}, {pipeline_mode = #tpu.pipeline_mode<synchronous>, transform_indices = @transform_5, window_bounds = array<i64: 32, 128>}, {pipeline_mode = #tpu.pipeline_mode<synchronous>, transform_indices = @transform_6, window_bounds = array<i64: 1, 128>}, {pipeline_mode = #tpu.pipeline_mode<synchronous>, transform_indices = @transform_7, window_bounds = array<i64: 128, 128>}, {pipeline_mode = #tpu.pipeline_mode<synchronous>, transform_indices = @transform_8, window_bounds = array<i64: 1, 128>}, {pipeline_mode = #tpu.pipeline_mode<synchronous>, transform_indices = @transform_9, window_bounds = array<i64: 1, 128>}, {pipeline_mode = #tpu.pipeline_mode<synchronous>, transform_indices = @transform_10, window_bounds = array<i64: 1, 1>}, {transform_indices = @transform_11, window_bounds = array<i64: 1, 2>}]} {
    %c0 = arith.constant 0 : index
    %c0_0 = arith.constant 0 : index
    %c0_1 = arith.constant 0 : index
    %0 = vector.load %arg1[%c0, %c0_0, %c0_1] : memref<2x8x768xbf16, #tpu.memory_space<vmem>>, vector<2x8x768xbf16>
    %1 = vector.shape_cast %0 : vector<2x8x768xbf16> to vector<16x768xbf16>
    %c0_2 = arith.constant 0 : index
    %c0_3 = arith.constant 0 : index
    %c0_4 = arith.constant 0 : index
    %2 = vector.load %arg2[%c0_2, %c0_3, %c0_4] : memref<2x8x1xf32, #tpu.memory_space<vmem>>, vector<2x8x1xf32>
    %3 = vector.shape_cast %2 : vector<2x8x1xf32> to vector<16x1xf32>
    %c0_5 = arith.constant 0 : index
    %c0_6 = arith.constant 0 : index
    %4 = vector.load %arg3[%c0_5, %c0_6] : memref<1x32xf32, #tpu.memory_space<vmem>>, vector<1x32xf32>
    %5 = vector.broadcast %3 : vector<16x1xf32> to vector<16x32xf32>
    %6 = vector.broadcast %4 : vector<1x32xf32> to vector<16x32xf32>
    %7 = arith.mulf %5, %6 : vector<16x32xf32>
    %c0_7 = arith.constant 0 : index
    %c0_8 = arith.constant 0 : index
    %8 = vector.load %arg4[%c0_7, %c0_8] : memref<1x32xf32, #tpu.memory_space<vmem>>, vector<1x32xf32>
    %9 = vector.broadcast %8 : vector<1x32xf32> to vector<16x32xf32>
    %10 = arith.addf %7, %9 : vector<16x32xf32>
    %11 = arith.negf %10 : vector<16x32xf32>
    %12 = math.exp %11 : vector<16x32xf32>
    %cst = arith.constant 1.000000e+00 : f32
    %13 = vector.broadcast %cst : f32 to vector<16x32xf32>
    %14 = arith.addf %13, %12 : vector<16x32xf32>
    %15 = arith.divf %13, %14 : vector<16x32xf32>
    %16 = arith.mulf %10, %15 : vector<16x32xf32>
    %c0_9 = arith.constant 0 : index
    %c0_10 = arith.constant 0 : index
    %17 = vector.load %arg5[%c0_9, %c0_10] : memref<768x128xbf16, #tpu.memory_space<vmem>>, vector<768x128xbf16>
    %cst_11 = arith.constant dense<0.000000e+00> : vector<16x128xf32>
    %18 = tpu.matmul %1, %17, %cst_11 {dimension_numbers = #tpu.dot_dimension_numbers<[1], [0], [0], [1], [0, 0, 1, 1], [], []>} : vector<16x768xbf16>, vector<768x128xbf16>, vector<16x128xf32> -> vector<16x128xf32>
    %c0_12 = arith.constant 0 : index
    %c0_13 = arith.constant 0 : index
    %19 = vector.load %arg6[%c0_12, %c0_13] : memref<32x128xf32, #tpu.memory_space<vmem>>, vector<32x128xf32>
    %cst_14 = arith.constant dense<0.000000e+00> : vector<16x128xf32>
    %20 = tpu.matmul %16, %19, %cst_14 {dimension_numbers = #tpu.dot_dimension_numbers<[1], [0], [0], [1], [0, 0, 1, 1], [], []>} : vector<16x32xf32>, vector<32x128xf32>, vector<16x128xf32> -> vector<16x128xf32>
    %21 = arith.addf %18, %20 : vector<16x128xf32>
    %c0_15 = arith.constant 0 : index
    %c0_16 = arith.constant 0 : index
    %22 = vector.load %arg7[%c0_15, %c0_16] : memref<1x128xf32, #tpu.memory_space<vmem>>, vector<1x128xf32>
    %23 = vector.broadcast %22 : vector<1x128xf32> to vector<16x128xf32>
    %24 = arith.addf %21, %23 : vector<16x128xf32>
    %25 = arith.negf %24 : vector<16x128xf32>
    %26 = math.exp %25 : vector<16x128xf32>
    %cst_17 = arith.constant 1.000000e+00 : f32
    %27 = vector.broadcast %cst_17 : f32 to vector<16x128xf32>
    %28 = arith.addf %27, %26 : vector<16x128xf32>
    %29 = arith.divf %27, %28 : vector<16x128xf32>
    %30 = arith.mulf %24, %29 : vector<16x128xf32>
    %31 = arith.truncf %30 : vector<16x128xf32> to vector<16x128xbf16>
    %c0_18 = arith.constant 0 : index
    %c0_19 = arith.constant 0 : index
    %32 = vector.load %arg8[%c0_18, %c0_19] : memref<128x128xbf16, #tpu.memory_space<vmem>>, vector<128x128xbf16>
    %cst_20 = arith.constant dense<0.000000e+00> : vector<16x128xf32>
    %33 = tpu.matmul %31, %32, %cst_20 {dimension_numbers = #tpu.dot_dimension_numbers<[1], [0], [0], [1], [0, 0, 1, 1], [], []>} : vector<16x128xbf16>, vector<128x128xbf16>, vector<16x128xf32> -> vector<16x128xf32>
    %c0_21 = arith.constant 0 : index
    %c0_22 = arith.constant 0 : index
    %34 = vector.load %arg9[%c0_21, %c0_22] : memref<1x128xf32, #tpu.memory_space<vmem>>, vector<1x128xf32>
    %35 = vector.broadcast %34 : vector<1x128xf32> to vector<16x128xf32>
    %36 = arith.addf %33, %35 : vector<16x128xf32>
    %37 = vector.shape_cast %36 : vector<16x128xf32> to vector<2x8x128xf32>
    %cst_23 = arith.constant dense<0xFF800000> : vector<2x128xf32>
    %38 = vector.multi_reduction <maximumf>, %37, %cst_23 [1] : vector<2x8x128xf32> to vector<2x128xf32>
    %39 = vector.shape_cast %38 : vector<2x128xf32> to vector<2x1x128xf32>
    %40 = vector.broadcast %39 : vector<2x1x128xf32> to vector<2x8x128xf32>
    %41 = arith.subf %37, %40 : vector<2x8x128xf32>
    %42 = math.exp %41 : vector<2x8x128xf32>
    %cst_24 = arith.constant dense<0.000000e+00> : vector<2x128xf32>
    %43 = vector.multi_reduction <add>, %42, %cst_24 [1] : vector<2x8x128xf32> to vector<2x128xf32>
    %44 = vector.shape_cast %43 : vector<2x128xf32> to vector<2x1x128xf32>
    %45 = tpu.reciprocal %44 {approx = true} : vector<2x1x128xf32> -> vector<2x1x128xf32>
    %46 = vector.broadcast %45 : vector<2x1x128xf32> to vector<2x8x128xf32>
    %47 = arith.mulf %42, %46 : vector<2x8x128xf32>
    %48 = vector.shape_cast %30 : vector<16x128xf32> to vector<2x8x128xf32>
    %49 = arith.mulf %47, %48 : vector<2x8x128xf32>
    %cst_25 = arith.constant dense<0.000000e+00> : vector<2x128xf32>
    %50 = vector.multi_reduction <add>, %49, %cst_25 [1] : vector<2x8x128xf32> to vector<2x128xf32>
    %c0_26 = arith.constant 0 : index
    %c0_27 = arith.constant 0 : index
    %51 = vector.load %arg10[%c0_26, %c0_27] : memref<1x128xf32, #tpu.memory_space<vmem>>, vector<1x128xf32>
    %52 = vector.broadcast %51 : vector<1x128xf32> to vector<2x128xf32>
    %53 = arith.mulf %50, %52 : vector<2x128xf32>
    %cst_28 = arith.constant dense<0.000000e+00> : vector<2xf32>
    %54 = vector.multi_reduction <add>, %53, %cst_28 [1] : vector<2x128xf32> to vector<2xf32>
    %55 = vector.shape_cast %54 : vector<2xf32> to vector<2x1xf32>
    %c0_29 = arith.constant 0 : index
    %c0_30 = arith.constant 0 : index
    %56 = vector.load %arg11[%c0_29, %c0_30] : memref<1x1xf32, #tpu.memory_space<vmem>>, vector<1x1xf32>
    %57 = vector.broadcast %56 : vector<1x1xf32> to vector<2x1xf32>
    %58 = arith.addf %55, %57 : vector<2x1xf32>
    %59 = vector.shape_cast %58 : vector<2x1xf32> to vector<1x2xf32>
    %c0_31 = arith.constant 0 : index
    %c0_32 = arith.constant 0 : index
    %60 = vector.load %arg12[%c0_31, %c0_32] : memref<1x2xf32, #tpu.memory_space<vmem>>, vector<1x2xf32>
    tpu.vector_store %arg12[%c0_31, %c0_32], %59 {strides = array<i32>} : memref<1x2xf32, #tpu.memory_space<vmem>>, vector<1x2xf32>,
    return
  }
  func.func @transform_0(%arg0: i32) -> (i32, i32, i32) {
    %c0_i32 = arith.constant 0 : i32
    %c0_i32_0 = arith.constant 0 : i32
    %c0_i32_1 = arith.constant 0 : i32
    return %arg0, %c0_i32, %c0_i32_0 : i32, i32, i32
  }
  func.func @transform_1(%arg0: i32) -> (i32, i32, i32) {
    %c0_i32 = arith.constant 0 : i32
    %c0_i32_0 = arith.constant 0 : i32
    %c0_i32_1 = arith.constant 0 : i32
    return %arg0, %c0_i32, %c0_i32_0 : i32, i32, i32
  }
  func.func @transform_2(%arg0: i32) -> (i32, i32) {
    %c0_i32 = arith.constant 0 : i32
    %c0_i32_0 = arith.constant 0 : i32
    %c0_i32_1 = arith.constant 0 : i32
    return %c0_i32, %c0_i32_0 : i32, i32
  }
  func.func @transform_3(%arg0: i32) -> (i32, i32) {
    %c0_i32 = arith.constant 0 : i32
    %c0_i32_0 = arith.constant 0 : i32
    %c0_i32_1 = arith.constant 0 : i32
    return %c0_i32, %c0_i32_0 : i32, i32
  }
  func.func @transform_4(%arg0: i32) -> (i32, i32) {
    %c0_i32 = arith.constant 0 : i32
    %c0_i32_0 = arith.constant 0 : i32
    %c0_i32_1 = arith.constant 0 : i32
    return %c0_i32, %c0_i32_0 : i32, i32
  }
  func.func @transform_5(%arg0: i32) -> (i32, i32) {
    %c0_i32 = arith.constant 0 : i32
    %c0_i32_0 = arith.constant 0 : i32
    %c0_i32_1 = arith.constant 0 : i32
    return %c0_i32, %c0_i32_0 : i32, i32
  }
  func.func @transform_6(%arg0: i32) -> (i32, i32) {
    %c0_i32 = arith.constant 0 : i32
    %c0_i32_0 = arith.constant 0 : i32
    %c0_i32_1 = arith.constant 0 : i32
    return %c0_i32, %c0_i32_0 : i32, i32
  }
  func.func @transform_7(%arg0: i32) -> (i32, i32) {
    %c0_i32 = arith.constant 0 : i32
    %c0_i32_0 = arith.constant 0 : i32
    %c0_i32_1 = arith.constant 0 : i32
    return %c0_i32, %c0_i32_0 : i32, i32
  }
  func.func @transform_8(%arg0: i32) -> (i32, i32) {
    %c0_i32 = arith.constant 0 : i32
    %c0_i32_0 = arith.constant 0 : i32
    %c0_i32_1 = arith.constant 0 : i32
    return %c0_i32, %c0_i32_0 : i32, i32
  }
  func.func @transform_9(%arg0: i32) -> (i32, i32) {
    %c0_i32 = arith.constant 0 : i32
    %c0_i32_0 = arith.constant 0 : i32
    %c0_i32_1 = arith.constant 0 : i32
    return %c0_i32, %c0_i32_0 : i32, i32
  }
  func.func @transform_10(%arg0: i32) -> (i32, i32) {
    %c0_i32 = arith.constant 0 : i32
    %c0_i32_0 = arith.constant 0 : i32
    %c0_i32_1 = arith.constant 0 : i32
    return %c0_i32, %c0_i32_0 : i32, i32
  }
  func.func @transform_11(%arg0: i32) -> (i32, i32) {
    %c0_i32 = arith.constant 0 : i32
    %c0_i32_0 = arith.constant 0 : i32
    return %arg0, %c0_i32 : i32, i32
  }
}

</mosaic_0001>

<llo_original>
// kernel: tpu_custom_call.1
$region0: #{tpu_custom_call.1}
  #allocation0 [shape = 'u32[]', space=smem, size = 0x4, offset = 0x4, fixed_abs, tag = 'smem constant byte address 0x4 - core index']
  #allocation1 [shape = 'u32[72,128]{1,0:T(1,128)}', space=vmem, size = 0x9000, scoped, tag = 'internal scratch']
  #allocation2 [shape = 'f32[1,1]{1,0:T(1,128)S(1)}', space=vmem, size = 0x200, scoped, tag = 'scoped memory for tpu_custom_call.1']
  %s0 = inlined_call_operand.hbm [shape: bf16[2,8,768], index: 0, kind: input, shape index: {}]
  %s1 = inlined_call_operand.vmem [shape: f32[2,8,1], index: 1, kind: input, shape index: {}]
  %s2 = inlined_call_operand.vmem [shape: f32[1,32], index: 2, kind: input, shape index: {}]
  %s3 = inlined_call_operand.vmem [shape: f32[1,32], index: 3, kind: input, shape index: {}]
  %s4 = inlined_call_operand.hbm [shape: bf16[768,128], index: 4, kind: input, shape index: {}]
  %s5 = inlined_call_operand.hbm [shape: f32[32,128], index: 5, kind: input, shape index: {}]
  %s6 = inlined_call_operand.vmem [shape: f32[1,128], index: 6, kind: input, shape index: {}]
  %s7 = inlined_call_operand.hbm [shape: bf16[128,128], index: 7, kind: input, shape index: {}]
  %s8 = inlined_call_operand.vmem [shape: f32[1,128], index: 8, kind: input, shape index: {}]
  %s9 = inlined_call_operand.vmem [shape: f32[1,128], index: 9, kind: input, shape index: {}]
  %s10 = inlined_call_operand.<no memory space> [shape: f32[1,1], index: 10, kind: input, shape index: {}]
  %s11 = inlined_call_operand.hbm [shape: f32[1,2], index: 11, kind: output, shape index: {}]
  %s12 = sld [smem:[#allocation0]]
  $region70: #{tpu_custom_call.1} parent=0
    _
  %s14 = ssub.s32 1, %s12
  %s15 = scalar_select 0, %s14, %s12
  %v16 = vstv %s10
  %17 = vst [vmem:[#allocation2] sm:$0x1] %v16
  $region1: #{tpu_custom_call.1} parent=0
    #allocation3 [shape = 'u8[24576]{0}', space=vmem, size = 0x6000, scoped, tag = 'input window, operand 0, single buffered']
    #allocation4 [shape = 's32[1]{0}', space=sflag, size = 0x4, scoped, tag = 'scoped memory for tpu_custom_call.1']
    #allocation5 [shape = 's32[1]{0}', space=sflag, size = 0x4, scoped, tag = 'scoped memory for tpu_custom_call.1']
    #allocation6 [shape = 'u8[196608]{0}', space=vmem, size = 0x30000, scoped, tag = 'input window, operand 4, single buffered']
    #allocation7 [shape = 's32[1]{0}', space=sflag, size = 0x4, scoped, tag = 'scoped memory for tpu_custom_call.1']
    #allocation8 [shape = 'u8[16384]{0}', space=vmem, size = 0x4000, scoped, tag = 'input window, operand 5, single buffered']
    #allocation9 [shape = 'u8[32768]{0}', space=vmem, size = 0x8000, scoped, tag = 'input window, operand 7, single buffered']
    #allocation10 [shape = 's32[1]{0}', space=sflag, size = 0x4, scoped, tag = 'scoped memory for tpu_custom_call.1']
    #allocation11 [shape = 'u8[512]{0}', space=vmem, size = 0x400, scoped, tag = 'output window, operand 0, single buffered']
    %18 = vsyncpa [#allocation4], 0
    %19 = vsyncpa [#allocation7], 0
    %20 = vsyncpa [#allocation10], 0
    %21 = vsyncpa [#allocation5], 0
    // Predicated region
    $region2: #{tpu_custom_call.1} parent=1 // pred_check
      _
    $region3: #{tpu_custom_call.1} parent=1 // pred_check_branch
      %23 = sbr.rel (0) target = $region5
    $region4: #{tpu_custom_call.1} parent=1 // pred_region
      %25 = vsyncadd [#allocation4], 0
      %s26 = sshll.u32 %s0, 4
      %s27 = int_to_ptr.hbm [resolvable:$true] %s26
      %s28 = sshll.u32 [#allocation3], 4
      %s29 = int_to_ptr.vmem [resolvable:$true] %s28
      %34 = dma.hbm_to_vmem [thread:$0]  %s27, 768, %s29, [#allocation4], 384, 384, 24
    $region5: #{tpu_custom_call.1} parent=1 // pred_fallthru
      _
    // Predicated region
    $region6: #{tpu_custom_call.1} parent=1 // pred_check
      _
    $region7: #{tpu_custom_call.1} parent=1 // pred_check_branch
      %36 = sbr.rel (0) target = $region9
    $region8: #{tpu_custom_call.1} parent=1 // pred_region
      _
    $region9: #{tpu_custom_call.1} parent=1 // pred_fallthru
      _
    // Predicated region
    $region10: #{tpu_custom_call.1} parent=1 // pred_check
      _
    $region11: #{tpu_custom_call.1} parent=1 // pred_check_branch
      %38 = sbr.rel (0) target = $region13
    $region12: #{tpu_custom_call.1} parent=1 // pred_region
      _
    $region13: #{tpu_custom_call.1} parent=1 // pred_fallthru
      _
    // Predicated region
    $region14: #{tpu_custom_call.1} parent=1 // pred_check
      _
    $region15: #{tpu_custom_call.1} parent=1 // pred_check_branch
      %40 = sbr.rel (0) target = $region17
    $region16: #{tpu_custom_call.1} parent=1 // pred_region
      _
    $region17: #{tpu_custom_call.1} parent=1 // pred_fallthru
      _
    // Predicated region
    $region18: #{tpu_custom_call.1} parent=1 // pred_check
      _
    $region19: #{tpu_custom_call.1} parent=1 // pred_check_branch
      %42 = sbr.rel (0) target = $region21
    $region20: #{tpu_custom_call.1} parent=1 // pred_region
      %44 = vsyncadd [#allocation7], 0
      %s45 = sshll.u32 %s4, 4
      %s46 = int_to_ptr.hbm [resolvable:$true] %s45
      %s47 = sshll.u32 [#allocation6], 4
      %s48 = int_to_ptr.vmem [resolvable:$true] %s47
      %53 = dma.hbm_to_vmem [thread:$0]  %s46, 6144, %s48, [#allocation7], 64, 64, 4
    $region21: #{tpu_custom_call.1} parent=1 // pred_fallthru
      _
    // Predicated region
    $region22: #{tpu_custom_call.1} parent=1 // pred_check
      _
    $region23: #{tpu_custom_call.1} parent=1 // pred_check_branch
      %55 = sbr.rel (0) target = $region25
    $region24: #{tpu_custom_call.1} parent=1 // pred_region
      %57 = vsyncadd [#allocation7], 0
      %s58 = sshll.u32 %s5, 4
      %s59 = int_to_ptr.hbm [resolvable:$true] %s58
      %s60 = sshll.u32 [#allocation8], 4
      %s61 = int_to_ptr.vmem [resolvable:$true] %s60
      %66 = dma.hbm_to_vmem [thread:$0]  %s59, 512, %s61, [#allocation7], 128, 128, 8
    $region25: #{tpu_custom_call.1} parent=1 // pred_fallthru
      _
    // Predicated region
    $region26: #{tpu_custom_call.1} parent=1 // pred_check
      _
    $region27: #{tpu_custom_call.1} parent=1 // pred_check_branch
      %68 = sbr.rel (0) target = $region29
    $region28: #{tpu_custom_call.1} parent=1 // pred_region
      _
    $region29: #{tpu_custom_call.1} parent=1 // pred_fallthru
      _
    // Predicated region
    $region30: #{tpu_custom_call.1} parent=1 // pred_check
      _
    $region31: #{tpu_custom_call.1} parent=1 // pred_check_branch
      %70 = sbr.rel (0) target = $region33
    $region32: #{tpu_custom_call.1} parent=1 // pred_region
      %72 = vsyncadd [#allocation10], 0
      %s73 = sshll.u32 %s7, 4
      %s74 = int_to_ptr.hbm [resolvable:$true] %s73
      %s75 = sshll.u32 [#allocation9], 4
      %s76 = int_to_ptr.vmem [resolvable:$true] %s75
      %81 = dma.hbm_to_vmem [thread:$0]  %s74, 1024, %s76, [#allocation10], 64, 64, 4
    $region33: #{tpu_custom_call.1} parent=1 // pred_fallthru
      _
    // Predicated region
    $region34: #{tpu_custom_call.1} parent=1 // pred_check
      _
    $region35: #{tpu_custom_call.1} parent=1 // pred_check_branch
      %83 = sbr.rel (0) target = $region37
    $region36: #{tpu_custom_call.1} parent=1 // pred_region
      _
    $region37: #{tpu_custom_call.1} parent=1 // pred_fallthru
      _
    // Predicated region
    $region38: #{tpu_custom_call.1} parent=1 // pred_check
      _
    $region39: #{tpu_custom_call.1} parent=1 // pred_check_branch
      %85 = sbr.rel (0) target = $region41
    $region40: #{tpu_custom_call.1} parent=1 // pred_region
      _
    $region41: #{tpu_custom_call.1} parent=1 // pred_fallthru
      _
    // Predicated region
    $region42: #{tpu_custom_call.1} parent=1 // pred_check
      _
    $region43: #{tpu_custom_call.1} parent=1 // pred_check_branch
      %87 = sbr.rel (0) target = $region45
    $region44: #{tpu_custom_call.1} parent=1 // pred_region
      _
    $region45: #{tpu_custom_call.1} parent=1 // pred_fallthru
      _
    // Predicated region
    $region46: #{tpu_custom_call.1} parent=1 // pred_check
      _
    $region47: #{tpu_custom_call.1} parent=1 // pred_check_branch
      %89 = sbr.rel (0) target = $region49
    $region48: #{tpu_custom_call.1} parent=1 // pred_region
      %91 = dma.done [#allocation4], 768
    $region49: #{tpu_custom_call.1} parent=1 // pred_fallthru
      _
    // Predicated region
    $region50: #{tpu_custom_call.1} parent=1 // pred_check
      _
    $region51: #{tpu_custom_call.1} parent=1 // pred_check_branch
      %93 = sbr.rel (0) target = $region53
    $region52: #{tpu_custom_call.1} parent=1 // pred_region
      %95 = dma.done [#allocation7], 6144
    $region53: #{tpu_custom_call.1} parent=1 // pred_fallthru
      _
    // Predicated region
    $region54: #{tpu_custom_call.1} parent=1 // pred_check
      _
    $region55: #{tpu_custom_call.1} parent=1 // pred_check_branch
      %97 = sbr.rel (0) target = $region57
    $region56: #{tpu_custom_call.1} parent=1 // pred_region
      %99 = dma.done [#allocation7], 512
    $region57: #{tpu_custom_call.1} parent=1 // pred_fallthru
      _
    // Predicated region
    $region58: #{tpu_custom_call.1} parent=1 // pred_check
      _
    $region59: #{tpu_custom_call.1} parent=1 // pred_check_branch
      %101 = sbr.rel (0) target = $region61
    $region60: #{tpu_custom_call.1} parent=1 // pred_region
      %103 = dma.done [#allocation10], 1024
    $region61: #{tpu_custom_call.1} parent=1 // pred_fallthru
      _
    %v104 = vld [vmem:[#allocation3] sm:$0xff]
    %v105 = vld [vmem:[#allocation3 + $0x8] sm:$0xff]
    %v106 = vld [vmem:[#allocation3 + $0x10] sm:$0xff]
    %v107 = vld [vmem:[#allocation3 + $0x18] sm:$0xff]
    %v108 = vld [vmem:[#allocation3 + $0x20] sm:$0xff]
    %v109 = vld [vmem:[#allocation3 + $0x28] sm:$0xff]
    %v110 = vld [vmem:[%s1] sm:$0xff]
    %v111 = vld [vmem:[%s1 + $0x8] sm:$0xff]
    %v112 = vld [vmem:[%s2] sm:$0x1]
    %114 = vset.pattern.permute.xlu0 0
    %115 = vperm.xlu0 %114, %v110
    %v116 = vpop.permute.xlu0 %115
    %119 = vset.pattern.permute.xlu0 0
    %120 = vperm.xlu0 %119, %v111
    %v121 = vpop.permute.xlu0 %120
    %v124 = vperm.slane %v112, 0
    %v126 = vmul.f32 %v116, %v124
    %v127 = vmul.f32 %v121, %v124
    %v128 = vld [vmem:[%s3] sm:$0x1]
    %v130 = vperm.slane %v128, 0
    %v132 = vadd.f32 %v126, %v130
    %v133 = vadd.f32 %v127, %v130
    %v134 = vxor.u32 %v132, 2147483648
    %v135 = vxor.u32 %v133, 2147483648
    %v136 = vmul.f32 %v134, 1.442695
    %v137 = vpow.pop %v136
    %v138 = vmul.f32 %v135, 1.442695
    %v139 = vpow.pop %v138
    %v140 = vadd.f32 %v137, 1.0
    %v141 = vadd.f32 %v139, 1.0
    %v142 = vrcp.pop %v140
    %v143 = vmul.f32 %v140, %v142
    %v144 = vsub.f32 1.0, %v143
    %v145 = vmul.f32 %v142, %v144
    %v146 = vadd.f32 %v142, %v145
    %vm147 = vweird.f32 %v140
    %vm148 = vweird.f32 %v142
    %vm149 = vmor %vm147, %vm148
    %v150 = vsel %vm149, %v142, %v146
    %v151 = vand.u32 2147483647, %v140
    %vm152 = vcmp.eq.f32.partialorder %v151, 8.507059e+37
    %v153 = vand.u32 %v140, 2147483648
    %v154 = vor.u32 1.1754944e-38, %v153
    %v155 = vsel %vm152, %v154, %v150
    %v156 = vmul.f32 1.0, %v155
    %v157 = vrcp.pop %v141
    %v158 = vmul.f32 %v141, %v157
    %v159 = vsub.f32 1.0, %v158
    %v160 = vmul.f32 %v157, %v159
    %v161 = vadd.f32 %v157, %v160
    %vm162 = vweird.f32 %v141
    %vm163 = vweird.f32 %v157
    %vm164 = vmor %vm162, %vm163
    %v165 = vsel %vm164, %v157, %v161
    %v166 = vand.u32 2147483647, %v141
    %vm167 = vcmp.eq.f32.partialorder %v166, 8.507059e+37
    %v168 = vand.u32 %v141, 2147483648
    %v169 = vor.u32 1.1754944e-38, %v168
    %v170 = vsel %vm167, %v169, %v165
    %v171 = vmul.f32 1.0, %v170
    %v172 = vmul.f32 %v132, %v156
    %v173 = vmul.f32 %v133, %v171
    %v174 = vld [vmem:[#allocation6] sm:$0xf]
    %v175 = vld [vmem:[#allocation6 + $0x4] sm:$0xf]
    %v176 = vld [vmem:[#allocation6 + $0x8] sm:$0xf]
    %v177 = vld [vmem:[#allocation6 + $0xc] sm:$0xf]
    %v178 = vld [vmem:[#allocation6 + $0x10] sm:$0xf]
    %v179 = vld [vmem:[#allocation6 + $0x14] sm:$0xf]
    %v180 = vld [vmem:[#allocation6 + $0x18] sm:$0xf]
    %v181 = vld [vmem:[#allocation6 + $0x1c] sm:$0xf]
    %v182 = vld [vmem:[#allocation6 + $0x20] sm:$0xf]
    %v183 = vld [vmem:[#allocation6 + $0x24] sm:$0xf]
    %v184 = vld [vmem:[#allocation6 + $0x28] sm:$0xf]
    %v185 = vld [vmem:[#allocation6 + $0x2c] sm:$0xf]
    %v186 = vld [vmem:[#allocation6 + $0x30] sm:$0xf]
    %v187 = vld [vmem:[#allocation6 + $0x34] sm:$0xf]
    %v188 = vld [vmem:[#allocation6 + $0x38] sm:$0xf]
    %v189 = vld [vmem:[#allocation6 + $0x3c] sm:$0xf]
    %v190 = vld [vmem:[#allocation6 + $0x40] sm:$0xf]
    %v191 = vld [vmem:[#allocation6 + $0x44] sm:$0xf]
    %v192 = vld [vmem:[#allocation6 + $0x48] sm:$0xf]
    %v193 = vld [vmem:[#allocation6 + $0x4c] sm:$0xf]
    %v194 = vld [vmem:[#allocation6 + $0x50] sm:$0xf]
    %v195 = vld [vmem:[#allocation6 + $0x54] sm:$0xf]
    %v196 = vld [vmem:[#allocation6 + $0x58] sm:$0xf]
    %v197 = vld [vmem:[#allocation6 + $0x5c] sm:$0xf]
    %v198 = vld [vmem:[#allocation6 + $0x60] sm:$0xf]
    %v199 = vld [vmem:[#allocation6 + $0x64] sm:$0xf]
    %v200 = vld [vmem:[#allocation6 + $0x68] sm:$0xf]
    %v201 = vld [vmem:[#allocation6 + $0x6c] sm:$0xf]
    %v202 = vld [vmem:[#allocation6 + $0x70] sm:$0xf]
    %v203 = vld [vmem:[#allocation6 + $0x74] sm:$0xf]
    %v204 = vld [vmem:[#allocation6 + $0x78] sm:$0xf]
    %v205 = vld [vmem:[#allocation6 + $0x7c] sm:$0xf]
    %v206 = vld [vmem:[#allocation6 + $0x80] sm:$0xf]
    %v207 = vld [vmem:[#allocation6 + $0x84] sm:$0xf]
    %v208 = vld [vmem:[#allocation6 + $0x88] sm:$0xf]
    %v209 = vld [vmem:[#allocation6 + $0x8c] sm:$0xf]
    %v210 = vld [vmem:[#allocation6 + $0x90] sm:$0xf]
    %v211 = vld [vmem:[#allocation6 + $0x94] sm:$0xf]
    %v212 = vld [vmem:[#allocation6 + $0x98] sm:$0xf]
    %v213 = vld [vmem:[#allocation6 + $0x9c] sm:$0xf]
    %v214 = vld [vmem:[#allocation6 + $0xa0] sm:$0xf]
    %v215 = vld [vmem:[#allocation6 + $0xa4] sm:$0xf]
    %v216 = vld [vmem:[#allocation6 + $0xa8] sm:$0xf]
    %v217 = vld [vmem:[#allocation6 + $0xac] sm:$0xf]
    %v218 = vld [vmem:[#allocation6 + $0xb0] sm:$0xf]
    %v219 = vld [vmem:[#allocation6 + $0xb4] sm:$0xf]
    %v220 = vld [vmem:[#allocation6 + $0xb8] sm:$0xf]
    %v221 = vld [vmem:[#allocation6 + $0xbc] sm:$0xf]
    %v222 = vld [vmem:[#allocation6 + $0xc0] sm:$0xf]
    %v223 = vld [vmem:[#allocation6 + $0xc4] sm:$0xf]
    %v224 = vld [vmem:[#allocation6 + $0xc8] sm:$0xf]
    %v225 = vld [vmem:[#allocation6 + $0xcc] sm:$0xf]
    %v226 = vld [vmem:[#allocation6 + $0xd0] sm:$0xf]
    %v227 = vld [vmem:[#allocation6 + $0xd4] sm:$0xf]
    %v228 = vld [vmem:[#allocation6 + $0xd8] sm:$0xf]
    %v229 = vld [vmem:[#allocation6 + $0xdc] sm:$0xf]
    %v230 = vld [vmem:[#allocation6 + $0xe0] sm:$0xf]
    %v231 = vld [vmem:[#allocation6 + $0xe4] sm:$0xf]
    %v232 = vld [vmem:[#allocation6 + $0xe8] sm:$0xf]
    %v233 = vld [vmem:[#allocation6 + $0xec] sm:$0xf]
    %v234 = vld [vmem:[#allocation6 + $0xf0] sm:$0xf]
    %v235 = vld [vmem:[#allocation6 + $0xf4] sm:$0xf]
    %v236 = vld [vmem:[#allocation6 + $0xf8] sm:$0xf]
    %v237 = vld [vmem:[#allocation6 + $0xfc] sm:$0xf]
    %v238 = vld [vmem:[#allocation6 + $0x100] sm:$0xf]
    %v239 = vld [vmem:[#allocation6 + $0x104] sm:$0xf]
    %v240 = vld [vmem:[#allocation6 + $0x108] sm:$0xf]
    %v241 = vld [vmem:[#allocation6 + $0x10c] sm:$0xf]
    %v242 = vld [vmem:[#allocation6 + $0x110] sm:$0xf]
    %v243 = vld [vmem:[#allocation6 + $0x114] sm:$0xf]
    %v244 = vld [vmem:[#allocation6 + $0x118] sm:$0xf]
    %v245 = vld [vmem:[#allocation6 + $0x11c] sm:$0xf]
    %v246 = vld [vmem:[#allocation6 + $0x120] sm:$0xf]
    %v247 = vld [vmem:[#allocation6 + $0x124] sm:$0xf]
    %v248 = vld [vmem:[#allocation6 + $0x128] sm:$0xf]
    %v249 = vld [vmem:[#allocation6 + $0x12c] sm:$0xf]
    %v250 = vld [vmem:[#allocation6 + $0x130] sm:$0xf]
    %v251 = vld [vmem:[#allocation6 + $0x134] sm:$0xf]
    %v252 = vld [vmem:[#allocation6 + $0x138] sm:$0xf]
    %v253 = vld [vmem:[#allocation6 + $0x13c] sm:$0xf]
    %v254 = vld [vmem:[#allocation6 + $0x140] sm:$0xf]
    %v255 = vld [vmem:[#allocation6 + $0x144] sm:$0xf]
    %v256 = vld [vmem:[#allocation6 + $0x148] sm:$0xf]
    %v257 = vld [vmem:[#allocation6 + $0x14c] sm:$0xf]
    %v258 = vld [vmem:[#allocation6 + $0x150] sm:$0xf]
    %v259 = vld [vmem:[#allocation6 + $0x154] sm:$0xf]
    %v260 = vld [vmem:[#allocation6 + $0x158] sm:$0xf]
    %v261 = vld [vmem:[#allocation6 + $0x15c] sm:$0xf]
    %v262 = vld [vmem:[#allocation6 + $0x160] sm:$0xf]
    %v263 = vld [vmem:[#allocation6 + $0x164] sm:$0xf]
    %v264 = vld [vmem:[#allocation6 + $0x168] sm:$0xf]
    %v265 = vld [vmem:[#allocation6 + $0x16c] sm:$0xf]
    %v266 = vld [vmem:[#allocation6 + $0x170] sm:$0xf]
    %v267 = vld [vmem:[#allocation6 + $0x174] sm:$0xf]
    %v268 = vld [vmem:[#allocation6 + $0x178] sm:$0xf]
    %v269 = vld [vmem:[#allocation6 + $0x17c] sm:$0xf]
    %v270 = vld [vmem:[#allocation8] sm:$0xff]
    %v271 = vld [vmem:[#allocation8 + $0x8] sm:$0xff]
    %v272 = vld [vmem:[#allocation8 + $0x10] sm:$0xff]
    %v273 = vld [vmem:[#allocation8 + $0x18] sm:$0xff]
    %vm274 = vcmask 261120
    %v276 = vsel %vm274, %v172, 0
    %v279 = vsel %vm274, %v173, 0
    %281 = vmatpush.msra.mxu0 0.0
    %282 = vmatpush.msra.mxu0 0.0
    %283 = vmatpush.msra.mxu0 0.0
    %284 = vmatpush.msra.mxu0 0.0
    %285 = vmatpush.msra.mxu0 0.0
    %286 = vmatpush.msra.mxu0 0.0
    %287 = vmatpush.msra.mxu0 0.0
    %288 = vmatpush.msra.mxu0 0.0
    %289 = vmatpush.msra.mxu0 0.0
    %290 = vmatpush.msra.mxu0 0.0
    %291 = vmatpush.msra.mxu0 0.0
    %292 = vmatpush.msra.mxu0 0.0
    %293 = vmatpush.msra.mxu0 %v273
    %294 = vmatpush.msra.mxu0 %v272
    %295 = vmatpush.msra.mxu0 %v271
    %296 = vmatpush.msra.mxu0 %v270
    %297 = vmatmul.f32.gmra.mxu0 %v276
    %v298 = vpop.f32.mrf.mxu0
    %v299 = vadd.f32 0.0, %v298
    %300 = vmatmul.f32.gmra.mxu0 %v279
    %v301 = vpop.f32.mrf.mxu0
    %v302 = vadd.f32 0.0, %v301
    %303 = vdwg.mxu0
    %v310 = vunpack.c.l.b16 %v104
    %v311 = vunpack.c.h.b16 %v104
    %v312 = vunpack.c.l.b16 %v105
    %v313 = vunpack.c.h.b16 %v105
    %v314 = vunpack.c.l.b16 %v106
    %v315 = vunpack.c.h.b16 %v106
    %v316 = vunpack.c.l.b16 %v107
    %v317 = vunpack.c.h.b16 %v107
    %v318 = vunpack.c.l.b16 %v108
    %v319 = vunpack.c.h.b16 %v108
    %v320 = vunpack.c.l.b16 %v109
    %v321 = vunpack.c.h.b16 %v109
    %v322 = vpack.c.b16 %v316, %v310
    %v323 = vpack.c.b16 %v317, %v311
    %v324 = vpack.c.b16 %v318, %v312
    %v325 = vpack.c.b16 %v319, %v313
    %v326 = vpack.c.b16 %v320, %v314
    %v327 = vpack.c.b16 %v321, %v315
    %v430 = vunpack.c.l.b16 %v174
    %v431 = vunpack.c.l.b16 %v175
    %v432 = vunpack.c.l.b16 %v176
    %v433 = vunpack.c.l.b16 %v177
    %v434 = vunpack.c.l.b16 %v178
    %v435 = vunpack.c.l.b16 %v179
    %v436 = vunpack.c.l.b16 %v180
    %v437 = vunpack.c.l.b16 %v181
    %v438 = vunpack.c.l.b16 %v182
    %v439 = vunpack.c.l.b16 %v183
    %v440 = vunpack.c.l.b16 %v184
    %v441 = vunpack.c.l.b16 %v185
    %v442 = vunpack.c.l.b16 %v186
    %v443 = vunpack.c.l.b16 %v187
    %v444 = vunpack.c.l.b16 %v188
    %v445 = vunpack.c.l.b16 %v189
    %v446 = vunpack.c.l.b16 %v190
    %v447 = vunpack.c.l.b16 %v191
    %v448 = vunpack.c.l.b16 %v192
    %v449 = vunpack.c.l.b16 %v193
    %v450 = vunpack.c.l.b16 %v194
    %v451 = vunpack.c.l.b16 %v195
    %v452 = vunpack.c.l.b16 %v196
    %v453 = vunpack.c.l.b16 %v197
    %v454 = vunpack.c.l.b16 %v198
    %v455 = vunpack.c.l.b16 %v199
    %v456 = vunpack.c.l.b16 %v200
    %v457 = vunpack.c.l.b16 %v201
    %v458 = vunpack.c.l.b16 %v202
    %v459 = vunpack.c.l.b16 %v203
    %v460 = vunpack.c.l.b16 %v204
    %v461 = vunpack.c.l.b16 %v205
    %v462 = vunpack.c.l.b16 %v206
    %v463 = vunpack.c.l.b16 %v207
    %v464 = vunpack.c.l.b16 %v208
    %v465 = vunpack.c.l.b16 %v209
    %v466 = vunpack.c.l.b16 %v210
    %v467 = vunpack.c.l.b16 %v211
    %v468 = vunpack.c.l.b16 %v212
    %v469 = vunpack.c.l.b16 %v213
    %v470 = vunpack.c.l.b16 %v214
    %v471 = vunpack.c.l.b16 %v215
    %v472 = vunpack.c.l.b16 %v216
    %v473 = vunpack.c.l.b16 %v217
    %v474 = vunpack.c.l.b16 %v218
    %v475 = vunpack.c.l.b16 %v219
    %v476 = vunpack.c.l.b16 %v220
    %v477 = vunpack.c.l.b16 %v221
    %v478 = vunpack.c.l.b16 %v222
    %v479 = vunpack.c.l.b16 %v223
    %v480 = vunpack.c.l.b16 %v224
    %v481 = vunpack.c.l.b16 %v225
    %v482 = vunpack.c.l.b16 %v226
    %v483 = vunpack.c.l.b16 %v227
    %v484 = vunpack.c.l.b16 %v228
    %v485 = vunpack.c.l.b16 %v229
    %v486 = vunpack.c.l.b16 %v230
    %v487 = vunpack.c.l.b16 %v231
    %v488 = vunpack.c.l.b16 %v232
    %v489 = vunpack.c.l.b16 %v233
    %v490 = vunpack.c.l.b16 %v234
    %v491 = vunpack.c.l.b16 %v235
    %v492 = vunpack.c.l.b16 %v236
    %v493 = vunpack.c.l.b16 %v237
    %v494 = vunpack.c.l.b16 %v238
    %v495 = vunpack.c.l.b16 %v239
    %v496 = vunpack.c.l.b16 %v240
    %v497 = vunpack.c.l.b16 %v241
    %v498 = vunpack.c.l.b16 %v242
    %v499 = vunpack.c.l.b16 %v243
    %v500 = vunpack.c.l.b16 %v244
    %v501 = vunpack.c.l.b16 %v245
    %v502 = vunpack.c.l.b16 %v246
    %v503 = vunpack.c.l.b16 %v247
    %v504 = vunpack.c.l.b16 %v248
    %v505 = vunpack.c.l.b16 %v249
    %v506 = vunpack.c.l.b16 %v250
    %v507 = vunpack.c.l.b16 %v251
    %v508 = vunpack.c.l.b16 %v252
    %v509 = vunpack.c.l.b16 %v253
    %v510 = vunpack.c.l.b16 %v254
    %v511 = vunpack.c.l.b16 %v255
    %v512 = vunpack.c.l.b16 %v256
    %v513 = vunpack.c.l.b16 %v257
    %v514 = vunpack.c.l.b16 %v258
    %v515 = vunpack.c.l.b16 %v259
    %v516 = vunpack.c.l.b16 %v260
    %v517 = vunpack.c.l.b16 %v261
    %v518 = vunpack.c.l.b16 %v262
    %v519 = vunpack.c.l.b16 %v263
    %v520 = vunpack.c.l.b16 %v264
    %v521 = vunpack.c.l.b16 %v265
    %v522 = vunpack.c.l.b16 %v266
    %v523 = vunpack.c.l.b16 %v267
    %v524 = vunpack.c.l.b16 %v268
    %v525 = vunpack.c.l.b16 %v269
    %v526 = vpack.c.b16 %v431, %v430
    %v527 = vpack.c.b16 %v433, %v432
    %v528 = vpack.c.b16 %v435, %v434
    %v529 = vpack.c.b16 %v437, %v436
    %v530 = vpack.c.b16 %v439, %v438
    %v531 = vpack.c.b16 %v441, %v440
    %v532 = vpack.c.b16 %v443, %v442
    %v533 = vpack.c.b16 %v445, %v444
    %v534 = vpack.c.b16 %v447, %v446
    %v535 = vpack.c.b16 %v449, %v448
    %v536 = vpack.c.b16 %v451, %v450
    %v537 = vpack.c.b16 %v453, %v452
    %v538 = vpack.c.b16 %v455, %v454
    %v539 = vpack.c.b16 %v457, %v456
    %v540 = vpack.c.b16 %v459, %v458
    %v541 = vpack.c.b16 %v461, %v460
    %v542 = vpack.c.b16 %v463, %v462
    %v543 = vpack.c.b16 %v465, %v464
    %v544 = vpack.c.b16 %v467, %v466
    %v545 = vpack.c.b16 %v469, %v468
    %v546 = vpack.c.b16 %v471, %v470
    %v547 = vpack.c.b16 %v473, %v472
    %v548 = vpack.c.b16 %v475, %v474
    %v549 = vpack.c.b16 %v477, %v476
    %v550 = vpack.c.b16 %v479, %v478
    %v551 = vpack.c.b16 %v481, %v480
    %v552 = vpack.c.b16 %v483, %v482
    %v553 = vpack.c.b16 %v485, %v484
    %v554 = vpack.c.b16 %v487, %v486
    %v555 = vpack.c.b16 %v489, %v488
    %v556 = vpack.c.b16 %v491, %v490
    %v557 = vpack.c.b16 %v493, %v492
    %v558 = vpack.c.b16 %v495, %v494
    %v559 = vpack.c.b16 %v497, %v496
    %v560 = vpack.c.b16 %v499, %v498
    %v561 = vpack.c.b16 %v501, %v500
    %v562 = vpack.c.b16 %v503, %v502
    %v563 = vpack.c.b16 %v505, %v504
    %v564 = vpack.c.b16 %v507, %v506
    %v565 = vpack.c.b16 %v509, %v508
    %v566 = vpack.c.b16 %v511, %v510
    %v567 = vpack.c.b16 %v513, %v512
    %v568 = vpack.c.b16 %v515, %v514
    %v569 = vpack.c.b16 %v517, %v516
    %v570 = vpack.c.b16 %v519, %v518
    %v571 = vpack.c.b16 %v521, %v520
    %v572 = vpack.c.b16 %v523, %v522
    %v573 = vpack.c.b16 %v525, %v524
    %622 = vmatpush.bf16.msra.mxu0 %v533
    %623 = vmatpush.bf16.msra.mxu0 %v532
    %624 = vmatpush.bf16.msra.mxu0 %v531
    %625 = vmatpush.bf16.msra.mxu0 %v530
    %626 = vmatpush.bf16.msra.mxu0 %v529
    %627 = vmatpush.bf16.msra.mxu0 %v528
    %628 = vmatpush.bf16.msra.mxu0 %v527
    %629 = vmatpush.bf16.msra.mxu0 %v526
    %630 = vmatmul.bf16.gmra.mxu0 %v322
    %v631 = vpop.f32.mrf.mxu0
    %v632 = vadd.f32 %v299, %v631
    %v633 = vpop.f32.mrf.mxu0
    %v634 = vadd.f32 %v302, %v633
    %635 = vdwg.mxu0
    %636 = vmatpush.bf16.msra.mxu0 %v541
    %637 = vmatpush.bf16.msra.mxu0 %v540
    %638 = vmatpush.bf16.msra.mxu0 %v539
    %639 = vmatpush.bf16.msra.mxu0 %v538
    %640 = vmatpush.bf16.msra.mxu0 %v537
    %641 = vmatpush.bf16.msra.mxu0 %v536
    %642 = vmatpush.bf16.msra.mxu0 %v535
    %643 = vmatpush.bf16.msra.mxu0 %v534
    %644 = vmatmul.bf16.gmra.mxu0 %v323
    %v645 = vpop.f32.mrf.mxu0
    %v646 = vadd.f32 %v632, %v645
    %v647 = vpop.f32.mrf.mxu0
    %v648 = vadd.f32 %v634, %v647
    %649 = vdwg.mxu0
    %650 = vmatpush.bf16.msra.mxu0 %v549
    %651 = vmatpush.bf16.msra.mxu0 %v548
    %652 = vmatpush.bf16.msra.mxu0 %v547
    %653 = vmatpush.bf16.msra.mxu0 %v546
    %654 = vmatpush.bf16.msra.mxu0 %v545
    %655 = vmatpush.bf16.msra.mxu0 %v544
    %656 = vmatpush.bf16.msra.mxu0 %v543
    %657 = vmatpush.bf16.msra.mxu0 %v542
    %658 = vmatmul.bf16.gmra.mxu0 %v324
    %v659 = vpop.f32.mrf.mxu0
    %v660 = vadd.f32 %v646, %v659
    %v661 = vpop.f32.mrf.mxu0
    %v662 = vadd.f32 %v648, %v661
    %663 = vdwg.mxu0
    %664 = vmatpush.bf16.msra.mxu0 %v557
    %665 = vmatpush.bf16.msra.mxu0 %v556
    %666 = vmatpush.bf16.msra.mxu0 %v555
    %667 = vmatpush.bf16.msra.mxu0 %v554
    %668 = vmatpush.bf16.msra.mxu0 %v553
    %669 = vmatpush.bf16.msra.mxu0 %v552
    %670 = vmatpush.bf16.msra.mxu0 %v551
    %671 = vmatpush.bf16.msra.mxu0 %v550
    %672 = vmatmul.bf16.gmra.mxu0 %v325
    %v673 = vpop.f32.mrf.mxu0
    %v674 = vadd.f32 %v660, %v673
    %v675 = vpop.f32.mrf.mxu0
    %v676 = vadd.f32 %v662, %v675
    %677 = vdwg.mxu0
    %678 = vmatpush.bf16.msra.mxu0 %v565
    %679 = vmatpush.bf16.msra.mxu0 %v564
    %680 = vmatpush.bf16.msra.mxu0 %v563
    %681 = vmatpush.bf16.msra.mxu0 %v562
    %682 = vmatpush.bf16.msra.mxu0 %v561
    %683 = vmatpush.bf16.msra.mxu0 %v560
    %684 = vmatpush.bf16.msra.mxu0 %v559
    %685 = vmatpush.bf16.msra.mxu0 %v558
    %686 = vmatmul.bf16.gmra.mxu0 %v326
    %v687 = vpop.f32.mrf.mxu0
    %v688 = vadd.f32 %v674, %v687
    %v689 = vpop.f32.mrf.mxu0
    %v690 = vadd.f32 %v676, %v689
    %691 = vdwg.mxu0
    %692 = vmatpush.bf16.msra.mxu0 %v573
    %693 = vmatpush.bf16.msra.mxu0 %v572
    %694 = vmatpush.bf16.msra.mxu0 %v571
    %695 = vmatpush.bf16.msra.mxu0 %v570
    %696 = vmatpush.bf16.msra.mxu0 %v569
    %697 = vmatpush.bf16.msra.mxu0 %v568
    %698 = vmatpush.bf16.msra.mxu0 %v567
    %699 = vmatpush.bf16.msra.mxu0 %v566
    %700 = vmatmul.bf16.gmra.mxu0 %v327
    %v701 = vpop.f32.mrf.mxu0
    %v702 = vadd.f32 %v688, %v701
    %v703 = vpop.f32.mrf.mxu0
    %v704 = vadd.f32 %v690, %v703
    %705 = vdwg.mxu0
    %v706 = vld [vmem:[%s6] sm:$0x1]
    %v708 = vperm.slane %v706, 0
    %v710 = vadd.f32 %v702, %v708
    %v711 = vadd.f32 %v704, %v708
    %v712 = vxor.u32 %v710, 2147483648
    %v713 = vxor.u32 %v711, 2147483648
    %v714 = vmul.f32 %v712, 1.442695
    %v715 = vpow.pop %v714
    %v716 = vmul.f32 %v713, 1.442695
    %v717 = vpow.pop %v716
    %v718 = vadd.f32 %v715, 1.0
    %v719 = vadd.f32 %v717, 1.0
    %v720 = vrcp.pop %v718
    %v721 = vmul.f32 %v718, %v720
    %v722 = vsub.f32 1.0, %v721
    %v723 = vmul.f32 %v720, %v722
    %v724 = vadd.f32 %v720, %v723
    %vm725 = vweird.f32 %v718
    %vm726 = vweird.f32 %v720
    %vm727 = vmor %vm725, %vm726
    %v728 = vsel %vm727, %v720, %v724
    %v729 = vand.u32 2147483647, %v718
    %vm730 = vcmp.eq.f32.partialorder %v729, 8.507059e+37
    %v731 = vand.u32 %v718, 2147483648
    %v732 = vor.u32 1.1754944e-38, %v731
    %v733 = vsel %vm730, %v732, %v728
    %v734 = vmul.f32 1.0, %v733
    %v735 = vrcp.pop %v719
    %v736 = vmul.f32 %v719, %v735
    %v737 = vsub.f32 1.0, %v736
    %v738 = vmul.f32 %v735, %v737
    %v739 = vadd.f32 %v735, %v738
    %vm740 = vweird.f32 %v719
    %vm741 = vweird.f32 %v735
    %vm742 = vmor %vm740, %vm741
    %v743 = vsel %vm742, %v735, %v739
    %v744 = vand.u32 2147483647, %v719
    %vm745 = vcmp.eq.f32.partialorder %v744, 8.507059e+37
    %v746 = vand.u32 %v719, 2147483648
    %v747 = vor.u32 1.1754944e-38, %v746
    %v748 = vsel %vm745, %v747, %v743
    %v749 = vmul.f32 1.0, %v748
    %v750 = vmul.f32 %v710, %v734
    %v751 = vmul.f32 %v711, %v749
    %v752 = vpack.c.bf16 %v751, %v750
    %v753 = vld [vmem:[#allocation9] sm:$0xf]
    %v754 = vld [vmem:[#allocation9 + $0x4] sm:$0xf]
    %v755 = vld [vmem:[#allocation9 + $0x8] sm:$0xf]
    %v756 = vld [vmem:[#allocation9 + $0xc] sm:$0xf]
    %v757 = vld [vmem:[#allocation9 + $0x10] sm:$0xf]
    %v758 = vld [vmem:[#allocation9 + $0x14] sm:$0xf]
    %v759 = vld [vmem:[#allocation9 + $0x18] sm:$0xf]
    %v760 = vld [vmem:[#allocation9 + $0x1c] sm:$0xf]
    %v761 = vld [vmem:[#allocation9 + $0x20] sm:$0xf]
    %v762 = vld [vmem:[#allocation9 + $0x24] sm:$0xf]
    %v763 = vld [vmem:[#allocation9 + $0x28] sm:$0xf]
    %v764 = vld [vmem:[#allocation9 + $0x2c] sm:$0xf]
    %v765 = vld [vmem:[#allocation9 + $0x30] sm:$0xf]
    %v766 = vld [vmem:[#allocation9 + $0x34] sm:$0xf]
    %v767 = vld [vmem:[#allocation9 + $0x38] sm:$0xf]
    %v768 = vld [vmem:[#allocation9 + $0x3c] sm:$0xf]
    %v769 = vld [vmem:[%s8] sm:$0x1]
    %v771 = vperm.slane %v769, 0
    %v789 = vunpack.c.l.b16 %v753
    %v790 = vunpack.c.l.b16 %v754
    %v791 = vunpack.c.l.b16 %v755
    %v792 = vunpack.c.l.b16 %v756
    %v793 = vunpack.c.l.b16 %v757
    %v794 = vunpack.c.l.b16 %v758
    %v795 = vunpack.c.l.b16 %v759
    %v796 = vunpack.c.l.b16 %v760
    %v797 = vunpack.c.l.b16 %v761
    %v798 = vunpack.c.l.b16 %v762
    %v799 = vunpack.c.l.b16 %v763
    %v800 = vunpack.c.l.b16 %v764
    %v801 = vunpack.c.l.b16 %v765
    %v802 = vunpack.c.l.b16 %v766
    %v803 = vunpack.c.l.b16 %v767
    %v804 = vunpack.c.l.b16 %v768
    %v805 = vpack.c.b16 %v790, %v789
    %v806 = vpack.c.b16 %v792, %v791
    %v807 = vpack.c.b16 %v794, %v793
    %v808 = vpack.c.b16 %v796, %v795
    %v809 = vpack.c.b16 %v798, %v797
    %v810 = vpack.c.b16 %v800, %v799
    %v811 = vpack.c.b16 %v802, %v801
    %v812 = vpack.c.b16 %v804, %v803
    %821 = vmatpush.bf16.msra.mxu0 %v812
    %822 = vmatpush.bf16.msra.mxu0 %v811
    %823 = vmatpush.bf16.msra.mxu0 %v810
    %824 = vmatpush.bf16.msra.mxu0 %v809
    %825 = vmatpush.bf16.msra.mxu0 %v808
    %826 = vmatpush.bf16.msra.mxu0 %v807
    %827 = vmatpush.bf16.msra.mxu0 %v806
    %828 = vmatpush.bf16.msra.mxu0 %v805
    %829 = vmatmul.bf16.gmra.mxu0 %v752
    %v830 = vpop.f32.mrf.mxu0
    %v831 = vadd.f32 %v771, %v830
    %v832 = vpop.f32.mrf.mxu0
    %v833 = vadd.f32 %v771, %v832
    %834 = vdwg.mxu0
    %v835 = vrot.slane %v831, 4
    %v836 = vmax.f32 %v831, %v835
    %v837 = vrot.slane %v836, 2
    %v838 = vmax.f32 %v836, %v837
    %v839 = vrot.slane %v838, 1
    %v840 = vmax.f32 %v838, %v839
    %v841 = vrot.slane %v833, 4
    %v842 = vmax.f32 %v833, %v841
    %v843 = vrot.slane %v842, 2
    %v844 = vmax.f32 %v842, %v843
    %v845 = vrot.slane %v844, 1
    %v846 = vmax.f32 %v844, %v845
    %v847 = vsub.f32 %v831, %v840
    %v848 = vsub.f32 %v833, %v846
    %v849 = vmul.f32 %v847, 1.442695
    %v850 = vpow.pop %v849
    %v851 = vmul.f32 %v848, 1.442695
    %v852 = vpow.pop %v851
    %v853 = vrot.slane %v850, 4
    %v854 = vadd.f32 %v850, %v853
    %v855 = vrot.slane %v854, 2
    %v856 = vadd.f32 %v854, %v855
    %v857 = vrot.slane %v856, 1
    %v858 = vadd.f32 %v856, %v857
    %v859 = vrot.slane %v852, 4
    %v860 = vadd.f32 %v852, %v859
    %v861 = vrot.slane %v860, 2
    %v862 = vadd.f32 %v860, %v861
    %v863 = vrot.slane %v862, 1
    %v864 = vadd.f32 %v862, %v863
    %v865 = vrcp.pop %v858
    %v866 = vrcp.pop %v864
    %v867 = vmul.f32 %v850, %v865
    %v868 = vmul.f32 %v852, %v866
    %v869 = vmul.f32 %v867, %v750
    %v870 = vmul.f32 %v868, %v751
    %v871 = vrot.slane %v869, 4
    %v872 = vadd.f32 %v869, %v871
    %v873 = vrot.slane %v872, 2
    %v874 = vadd.f32 %v872, %v873
    %v875 = vrot.slane %v874, 1
    %v876 = vadd.f32 %v874, %v875
    %v877 = vrot.slane %v870, 4
    %v878 = vadd.f32 %v870, %v877
    %v879 = vrot.slane %v878, 2
    %v880 = vadd.f32 %v878, %v879
    %v881 = vrot.slane %v880, 1
    %v882 = vadd.f32 %v880, %v881
    %v883 = vld [vmem:[%s9] sm:$0x1]
    %v885 = vperm.slane %v883, 0
    %v887 = vmul.f32 %v876, %v885
    %v888 = vmul.f32 %v882, %v885
    %v891 = vrot.slane %v888, 7
    %vm892 = vcmask 1041409
    %v893 = vsel %vm892, %v891, %v887
    %vm895 = vcmask 1041408
    %v896 = vsel %vm895, %v893, 0.0
    %897 = vadd.xlane.f32.xlu0 %v896
    %v898 = vpop.xlane.xlu0 %897
    %v899 = vld [vmem:[#allocation2] sm:$0x1]
    %v901 = vperm.slane %v899, 0
    %v903 = vadd.f32 %v898, %v901
    %905 = vset.pattern.permute.xlu0 0
    %906 = vperm.xlu0 %905, %v903
    %v907 = vpop.permute.xlu0 %906
    %v908 = vlaneseq
    %v909 = vand.u32 %v908, 127
    %v910 = vperm.slane %v907, %v909
    %vm912 = vcmask 8192
    %913 = vst.msk [vmem:[#allocation11] sm:$0x1] %vm912, %v910
    // Predicated region
    $region62: #{tpu_custom_call.1} parent=1 // pred_check
      _
    $region63: #{tpu_custom_call.1} parent=1 // pred_check_branch
      %915 = sbr.rel (0) target = $region65
    $region64: #{tpu_custom_call.1} parent=1 // pred_region
      %917 = vsyncadd [#allocation5], 0
      %s919 = sshll.u32 [#allocation11], 4
      %s920 = int_to_ptr.vmem [resolvable:$true] %s919
      %s921 = sshll.u32 %s11, 4
      %s922 = int_to_ptr.hbm [resolvable:$true] %s921
      %924 = dma.vmem_to_hbm [thread:$0]  %s920, 16, %s922, [#allocation5]
    $region65: #{tpu_custom_call.1} parent=1 // pred_fallthru
      _
    // Predicated region
    $region66: #{tpu_custom_call.1} parent=1 // pred_check
      _
    $region67: #{tpu_custom_call.1} parent=1 // pred_check_branch
      %926 = sbr.rel (0) target = $region69
    $region68: #{tpu_custom_call.1} parent=1 // pred_region
      %928 = dma.done [#allocation5], 16
    $region69: #{tpu_custom_call.1} parent=1 // pred_fallthru
      _
    %929 = vsyncpa [#allocation4], 1
    %930 = vsyncpa [#allocation7], 1
    %931 = vsyncpa [#allocation10], 1
    %932 = vsyncpa [#allocation5], 1

</llo_original>
